<compile_context>
chip_gen: v6e
topology: v6e:2x2x1
jax: 0.10.0
libtpu: 0.0.40
codegen_flags: <defaults>
</compile_context>

<pallas_src>
import functools

import jax
import jax.numpy as jnp
from jax.experimental import pallas as pl
from jax.experimental.pallas import tpu as pltpu


def _round_up(x, m):
    return ((x + m - 1) // m) * m


def _vfe_kernel(feat_ref, npts_ref, out_ref, *, M, C, num_features, approx):
    # feat_ref: (TN, M*C) lane-dense block; npts_ref: (TN, 1); out_ref: (TN, num_features)
    x = feat_ref[...].astype(jnp.float32)

    # Constant selection/summation matrix: S[m*C + c, cc] = 1 iff c == cc (c < num_features).
    # Sum-over-points + channel slice == one small matmul on the (otherwise idle) MXU.
    row_ch = jax.lax.broadcasted_iota(jnp.int32, (M * C, num_features), 0) % C
    col = jax.lax.broadcasted_iota(jnp.int32, (M * C, num_features), 1)
    sel = (row_ch == col).astype(jnp.float32)

    s = jnp.dot(x, sel,
                preferred_element_type=jnp.float32,
                precision=jax.lax.Precision.HIGHEST)          # (TN, num_features)

    # Clamp to >= 1 (empty voxels) and divide via reciprocal (EUP slot).
    n = jnp.maximum(npts_ref[...].astype(jnp.float32), 1.0)    # (TN, 1)
    out_ref[...] = (s * pl.reciprocal(n, approx=approx)).astype(out_ref.dtype)


def hard_simple_vfe(features, num_points, coors=None, num_features=4,
                    tile_n=2048, approx_reciprocal=True, vmem_limit_bytes=None):
    """Pallas implementation of HardSimpleVFE.forward.

    features:   (N, M, C) float array, C >= num_features
    num_points: (N,) int/float array
    coors:      unused (kept for signature parity with the PyTorch module)
    returns:    (N, num_features) float32 mean of points per voxel
    """
    del coors
    N, M, C = features.shape
    assert C >= num_features

    # Lane-dense view of the point features; contiguous reshape -> free.
    feats2d = features.reshape(N, M * C)
    npts = num_points.reshape(N, 1)

    # Tile sizing: big tiles amortize per-step overhead, but keep several grid
    # steps so the "parallel" axis can still shard across TensorCores (v7x).
    n_pad = _round_up(max(N, 1), 8)
    tile_n = max(8, min(int(tile_n), _round_up(pl.cdiv(n_pad, 8), 8)))
    tile_n = min(tile_n, n_pad)

    grid = (pl.cdiv(N, tile_n),)

    kernel = functools.partial(
        _vfe_kernel, M=M, C=C, num_features=num_features, approx=approx_reciprocal)

    return pl.pallas_call(
        kernel,
        out_shape=jax.ShapeDtypeStruct((N, num_features), jnp.float32),
        grid_spec=pltpu.PrefetchScalarGridSpec(
            num_scalar_prefetch=0,
            grid=grid,
            in_specs=[
                # last block dim == full array dim (M*C) -> valid, lane-dense tiling
                pl.BlockSpec((tile_n, M * C), lambda i: (i, 0)),
                pl.BlockSpec((tile_n, 1), lambda i: (i, 0)),
            ],
            out_specs=pl.BlockSpec((tile_n, num_features), lambda i: (i, 0)),
        ),
        compiler_params=pltpu.CompilerParams(
            dimension_semantics=("parallel",),
            # raise if a swept tile_n hits the scoped-VMEM limit (v5e 16 MiB / v6e,v7x 32 MiB)
            vmem_limit_bytes=vmem_limit_bytes,
        ),
    )(feats2d, npts)


if __name__ == "__main__":
    key = jax.random.PRNGKey(0)
    k1, k2, k3, k4 = jax.random.split(key, 4)

    # Case 1: N=32 voxels, M=8 points/voxel, C=4 point features, num_features=4.
    N, M, C, F = 32, 8, 4, 4
    features = jax.random.normal(k1, (N, M, C), dtype=jnp.float32)
    num_points = jax.random.randint(k2, (N,), 1, M + 1, dtype=jnp.int32)
    coors = jnp.zeros((N, 4), dtype=jnp.int32)  # unused, signature parity only

    ref = (features[:, :, :F].sum(axis=1)
           / num_points.astype(jnp.float32)[:, None])

    # Exact-reciprocal path: tight check of the matmul-based reduction.
    out = jax.block_until_ready(
        hard_simple_vfe(features, num_points, coors, num_features=F,
                        approx_reciprocal=False))
    assert out.shape == (N, F)
    assert jnp.allclose(out, ref, rtol=1e-5, atol=1e-5)

    # Default (fast) path: approximate reciprocal on the EUP.
    out_fast = jax.block_until_ready(
        hard_simple_vfe(features, num_points, coors, num_features=F))
    assert jnp.allclose(out_fast, ref, rtol=1e-2, atol=1e-2)

    # Case 2: extra channels (C > num_features) and a partial last tile.
    N2, M2, C2 = 37, 8, 5
    features2 = jax.random.normal(k3, (N2, M2, C2), dtype=jnp.float32)
    num_points2 = jax.random.randint(k4, (N2,), 1, M2 + 1, dtype=jnp.int32)
    out2 = jax.block_until_ready(
        hard_simple_vfe(features2, num_points2, None, num_features=F,
                        approx_reciprocal=False))
    ref2 = (features2[:, :, :F].sum(axis=1)
            / num_points2.astype(jnp.float32)[:, None])
    assert out2.shape == (N2, F)
    assert jnp.allclose(out2, ref2, rtol=1e-5, atol=1e-5)

    print("KERNEL_OK")
</pallas_src>

<mosaic_0001>
module attributes {stable_mosaic.version = 11 : i64} {
  func.func @_vfe_kernel(%arg0: i32, %arg1: memref<8x32xf32, #tpu.memory_space<vmem>>, %arg2: memref<8x1xi32, #tpu.memory_space<vmem>>, %arg3: memref<8x4xf32, #tpu.memory_space<vmem>>) attributes {dimension_semantics = [#tpu.dimension_semantics<parallel>], iteration_bounds = array<i64: 4>, scalar_prefetch = 0 : i64, scratch_operands = 0 : i64, tpu.core_type = #tpu.core_type<tc>, window_params = [{transform_indices = @transform_0, window_bounds = array<i64: 8, 32>}, {transform_indices = @transform_1, window_bounds = array<i64: 8, 1>}, {transform_indices = @transform_2, window_bounds = array<i64: 8, 4>}]} {
    %c0 = arith.constant 0 : index
    %c0_0 = arith.constant 0 : index
    %0 = vector.load %arg1[%c0, %c0_0] : memref<8x32xf32, #tpu.memory_space<vmem>>, vector<8x32xf32>
    %1 = tpu.iota {dimensions = array<i32: 0>} : vector<32x4xi32>
    %c4_i32 = arith.constant 4 : i32
    %c0_i32 = arith.constant 0 : i32
    %2 = arith.cmpi eq, %c4_i32, %c0_i32 : i32
    %c1_i32 = arith.constant 1 : i32
    %3 = arith.select %2, %c1_i32, %c4_i32 : i32
    %4 = vector.broadcast %3 : i32 to vector<32x4xi32>
    %5 = arith.remsi %1, %4 : vector<32x4xi32>
    %c0_i32_1 = arith.constant 0 : i32
    %6 = vector.broadcast %c0_i32_1 : i32 to vector<32x4xi32>
    %7 = arith.cmpi ne, %5, %6 : vector<32x4xi32>
    %c0_i32_2 = arith.constant 0 : i32
    %8 = vector.broadcast %c0_i32_2 : i32 to vector<32x4xi32>
    %9 = arith.cmpi slt, %5, %8 : vector<32x4xi32>
    %c0_i32_3 = arith.constant 0 : i32
    %10 = arith.cmpi slt, %3, %c0_i32_3 : i32
    %11 = vector.broadcast %10 : i1 to vector<32x4xi1>
    %12 = vector.broadcast %11 : vector<32x4xi1> to vector<32x4xi1>
    %13 = arith.xori %9, %12 : vector<32x4xi1>
    %14 = arith.andi %13, %7 : vector<32x4xi1>
    %15 = vector.broadcast %3 : i32 to vector<32x4xi32>
    %16 = arith.addi %5, %15 : vector<32x4xi32>
    %17 = arith.select %14, %16, %5 : vector<32x4xi1>, vector<32x4xi32>
    %18 = tpu.iota {dimensions = array<i32: 1>} : vector<32x4xi32>
    %19 = arith.cmpi eq, %17, %18 : vector<32x4xi32>
    %20 = arith.extui %19 : vector<32x4xi1> to vector<32x4xi32>
    %21 = arith.sitofp %20 : vector<32x4xi32> to vector<32x4xf32>
    %cst = arith.constant dense<0.000000e+00> : vector<8x4xf32>
    %22 = tpu.matmul %0, %21, %cst {dimension_numbers = #tpu.dot_dimension_numbers<[1], [0], [0], [1], [0, 0, 1, 1], [], []>, precision = #tpu.contract_precision<fp32>} : vector<8x32xf32>, vector<32x4xf32>, vector<8x4xf32> -> vector<8x4xf32>
    %c0_4 = arith.constant 0 : index
    %c0_5 = arith.constant 0 : index
    %23 = vector.load %arg2[%c0_4, %c0_5] : memref<8x1xi32, #tpu.memory_space<vmem>>, vector<8x1xi32>
    %24 = arith.sitofp %23 : vector<8x1xi32> to vector<8x1xf32>
    %cst_6 = arith.constant 1.000000e+00 : f32
    %25 = vector.broadcast %cst_6 : f32 to vector<8x1xf32>
    %26 = arith.maximumf %24, %25 : vector<8x1xf32>
    %27 = tpu.reciprocal %26 : vector<8x1xf32> -> vector<8x1xf32>
    %28 = vector.broadcast %27 : vector<8x1xf32> to vector<8x4xf32>
    %29 = arith.mulf %22, %28 : vector<8x4xf32>
    %c0_7 = arith.constant 0 : index
    %c0_8 = arith.constant 0 : index
    %30 = vector.load %arg3[%c0_7, %c0_8] : memref<8x4xf32, #tpu.memory_space<vmem>>, vector<8x4xf32>
    tpu.vector_store %arg3[%c0_7, %c0_8], %29 {strides = array<i32>} : memref<8x4xf32, #tpu.memory_space<vmem>>, vector<8x4xf32>,
    return
  }
  func.func @transform_0(%arg0: i32) -> (i32, i32) {
    %c0_i32 = arith.constant 0 : i32
    %c0_i32_0 = arith.constant 0 : i32
    return %arg0, %c0_i32 : i32, i32
  }
  func.func @transform_1(%arg0: i32) -> (i32, i32) {
    %c0_i32 = arith.constant 0 : i32
    %c0_i32_0 = arith.constant 0 : i32
    return %arg0, %c0_i32 : i32, i32
  }
  func.func @transform_2(%arg0: i32) -> (i32, i32) {
    %c0_i32 = arith.constant 0 : i32
    %c0_i32_0 = arith.constant 0 : i32
    return %arg0, %c0_i32 : i32, i32
  }
}

</mosaic_0001>

<llo_original>
// kernel: tpu_custom_call.1
$region0: #{tpu_custom_call.1}
  #allocation0 [shape = 'u32[]', space=smem, size = 0x4, offset = 0x4, fixed_abs, tag = 'smem constant byte address 0x4 - core index']
  #allocation1 [shape = 'u32[144,128]{1,0:T(1,128)}', space=vmem, size = 0x12000, scoped, tag = 'internal scratch']
  %s0 = inlined_call_operand.vmem [shape: f32[32,32], index: 0, kind: input, shape index: {}]
  %s1 = inlined_call_operand.vmem [shape: s32[32,1], index: 1, kind: input, shape index: {}]
  %s2 = inlined_call_operand.vmem [shape: f32[32,4], index: 2, kind: output, shape index: {}]
  %s3 = sld [smem:[#allocation0]]
  $region41: #{tpu_custom_call.1} parent=0
    _
  %s5 = ssub.s32 1, %s3
  %s6 = scalar_select 0, %s5, %s3
  loop: start=0, step=1, limit=6
  $region2: #{tpu_custom_call.1} parent=0 // loop_pre_header
    _
  $region3: #{tpu_custom_call.1} parent=0 // loop_header
    %s8 = sphi 0, %s12
    %p9 = scmp.ge.s32.totalorder %s8, 6
    %s18 = sphi 0, %s20
    %s21 = sphi 0, %s18
    %s22 = sphi 0, %s21
    %s38 = sphi 0, %s22
    %s44 = sphi 0, %s46
    %s47 = sphi 0, %s44
    %s48 = sphi 0, %s47
    %s64 = sphi 0, %s48
    %s70 = sphi 0, %s72
    %s73 = sphi 0, %s70
    %s74 = sphi 0, %s73
    %s90 = sphi 0, %s74
  $region4: #{tpu_custom_call.1} parent=0 // loop_header_branch
    %11 = sbr.rel (%p9) target = $region8
  $region5: #{tpu_custom_call.1} parent=0 // loop_body
    %s13 = ssub.s32 %s8, 1
    %s14 = ssub.s32 %s8, 2
    %s15 = sadd.s32 %s8, 1
    %s16 = ssub.s32 %s8, %s15
    %p17 = scmp.eq.s32.totalorder %s16, 0
    %s19 = sadd.s32 %s18, 1
    %s20 = scalar_select %p17, %s18, %s19
    %p23 = pneg %p17
    %p24 = scmp.eq.s32.totalorder %s8, 3
    %p25 = por %p23, %p24
    %p26 = scmp.ne.s32.totalorder %s18, %s21
    %p27 = scmp.eq.s32.totalorder %s8, 0
    %p28 = por %p26, %p27
    %p29 = scmp.ne.s32.totalorder %s18, %s21
    %p30 = scmp.eq.s32.totalorder %s13, 3
    %p31 = por %p29, %p30
    %p32 = scmp.ne.s32.totalorder %s21, %s22
    %p33 = scmp.eq.s32.totalorder %s13, 0
    %p34 = por %p32, %p33
    %p35 = scmp.ne.s32.totalorder %s21, %s22
    %p36 = scmp.eq.s32.totalorder %s14, 3
    %p37 = por %p35, %p36
    %p39 = scmp.ne.s32.totalorder %s22, %s38
    %p40 = scmp.eq.s32.totalorder %s14, 0
    %p41 = por %p39, %p40
    %s42 = ssub.s32 %s8, %s15
    %p43 = scmp.eq.s32.totalorder %s42, 0
    %s45 = sadd.s32 %s44, 1
    %s46 = scalar_select %p43, %s44, %s45
    %p49 = pneg %p43
    %p50 = scmp.eq.s32.totalorder %s8, 3
    %p51 = por %p49, %p50
    %p52 = scmp.ne.s32.totalorder %s44, %s47
    %p53 = scmp.eq.s32.totalorder %s8, 0
    %p54 = por %p52, %p53
    %p55 = scmp.ne.s32.totalorder %s44, %s47
    %p56 = scmp.eq.s32.totalorder %s13, 3
    %p57 = por %p55, %p56
    %p58 = scmp.ne.s32.totalorder %s47, %s48
    %p59 = scmp.eq.s32.totalorder %s13, 0
    %p60 = por %p58, %p59
    %p61 = scmp.ne.s32.totalorder %s47, %s48
    %p62 = scmp.eq.s32.totalorder %s14, 3
    %p63 = por %p61, %p62
    %p65 = scmp.ne.s32.totalorder %s48, %s64
    %p66 = scmp.eq.s32.totalorder %s14, 0
    %p67 = por %p65, %p66
    %s68 = ssub.s32 %s8, %s15
    %p69 = scmp.eq.s32.totalorder %s68, 0
    %s71 = sadd.s32 %s70, 1
    %s72 = scalar_select %p69, %s70, %s71
    %p75 = pneg %p69
    %p76 = scmp.eq.s32.totalorder %s8, 3
    %p77 = por %p75, %p76
    %p78 = scmp.ne.s32.totalorder %s70, %s73
    %p79 = scmp.eq.s32.totalorder %s8, 0
    %p80 = por %p78, %p79
    %p81 = scmp.ne.s32.totalorder %s70, %s73
    %p82 = scmp.eq.s32.totalorder %s13, 3
    %p83 = por %p81, %p82
    %p84 = scmp.ne.s32.totalorder %s73, %s74
    %p85 = scmp.eq.s32.totalorder %s13, 0
    %p86 = por %p84, %p85
    %p87 = scmp.ne.s32.totalorder %s73, %s74
    %p88 = scmp.eq.s32.totalorder %s14, 3
    %p89 = por %p87, %p88
    %p91 = scmp.ne.s32.totalorder %s74, %s90
    %p92 = scmp.eq.s32.totalorder %s14, 0
    %p93 = por %p91, %p92
    %p94 = scmp.le.s32.totalorder 1, %s8
    %p95 = scmp.lt.s32.totalorder %s8, 5
    %p96 = pnand %p94, %p95
    %p97 = pneg %p96
    // Predicated region
    $region9: #{tpu_custom_call.1} parent=5 // pred_check
      _
    $region10: #{tpu_custom_call.1} parent=5 // pred_check_branch
      %99 = sbr.rel (%p96) target = $region12
    $region11: #{tpu_custom_call.1} parent=5 // pred_region
      %s100 = ssub.s32 %s8, 1
    $region12: #{tpu_custom_call.1} parent=5 // pred_fallthru
      _
    %p101 = scmp.lt.s32.totalorder %s8, 4
    // Predicated region
    $region13: #{tpu_custom_call.1} parent=5 // pred_check
      %p102 = pneg %p101
    $region14: #{tpu_custom_call.1} parent=5 // pred_check_branch
      %104 = sbr.rel (%p102) target = $region16
    $region15: #{tpu_custom_call.1} parent=5 // pred_region
      // Predicated region
      $region17: #{tpu_custom_call.1} parent=15 // pred_check
        %p105 = pneg %p28
      $region18: #{tpu_custom_call.1} parent=15 // pred_check_branch
        %107 = sbr.rel (%p105) target = $region20
      $region19: #{tpu_custom_call.1} parent=15 // pred_region
        %p108 = scmp.lt.s32.totalorder %s8, 3
        %s109 = scalar_select %p108, %s8, 3
        %s110 = smul.addr %s109, 8
        %s111 = scalar_lea.vmem %s0, %s110
      $region20: #{tpu_custom_call.1} parent=15 // pred_fallthru
        _
      // Predicated region
      $region21: #{tpu_custom_call.1} parent=15 // pred_check
        %p112 = pneg %p54
      $region22: #{tpu_custom_call.1} parent=15 // pred_check_branch
        %114 = sbr.rel (%p112) target = $region24
      $region23: #{tpu_custom_call.1} parent=15 // pred_region
        %p115 = scmp.lt.s32.totalorder %s8, 3
        %s116 = scalar_select %p115, %s8, 3
        %s117 = smul.addr %s116, 8
        %s118 = scalar_lea.vmem %s1, %s117
      $region24: #{tpu_custom_call.1} parent=15 // pred_fallthru
        _
    $region16: #{tpu_custom_call.1} parent=5 // pred_fallthru
      _
    %p119 = scmp.le.s32.totalorder 1, %s8
    %p120 = scmp.lt.s32.totalorder %s8, 5
    %p121 = pnand %p119, %p120
    %p122 = pneg %p121
    // Predicated region
    $region25: #{tpu_custom_call.1} parent=5 // pred_check
      _
    $region26: #{tpu_custom_call.1} parent=5 // pred_check_branch
      %124 = sbr.rel (%p121) target = $region28
    $region27: #{tpu_custom_call.1} parent=5 // pred_region
      %s125 = ssub.s32 %s8, 1
      %p126 = scmp.lt.s32.totalorder %s13, 3
      %s127 = scalar_select %p126, %s13, 3
      %s128 = smul.addr %s127, 8
      %s129 = scalar_lea.vmem %s0, %s128
      %p130 = pneg %p34
      %p131 = pneg %p31
      %p132 = scmp.lt.s32.totalorder %s13, 3
      %s133 = scalar_select %p132, %s13, 3
      %s134 = smul.addr %s133, 8
      %s135 = scalar_lea.vmem %s1, %s134
      %p136 = pneg %p60
      %p137 = pneg %p57
      %p138 = pneg %p86
      %p139 = pneg %p83
      %p140 = scmp.lt.s32.totalorder %s13, 3
      %s141 = scalar_select %p140, %s13, 3
      %s142 = smul.addr %s141, 8
      %s143 = scalar_lea.vmem %s2, %s142
      %p144 = scmp.lt.s32.totalorder %s13, 3
      %s145 = scalar_select %p144, %s13, 3
      %s146 = smul.addr %s145, 8
      %s147 = scalar_lea.vmem %s0, %s146
      %p148 = scmp.lt.s32.totalorder %s13, 3
      %s149 = scalar_select %p148, %s13, 3
      %s150 = smul.addr %s149, 8
      %s151 = scalar_lea.vmem %s1, %s150
      %p152 = scmp.lt.s32.totalorder %s13, 3
      %s153 = scalar_select %p152, %s13, 3
      %s154 = smul.addr %s153, 8
      %s155 = scalar_lea.vmem %s2, %s154
      %v156 = vld [vmem:[%s147] sm:$0xff]
      %v157 = vlaneseq
      %v158 = vshrl.u32 %v157, 7
      %v159 = vadd.s32 %v158, 8
      %v160 = vadd.s32 %v158, 16
      %v161 = vadd.s32 %v158, 24
      %vm162 = vcmp.lt.s32.totalorder %v158, 0
      %v163 = vsub.s32 0, %v158
      %v164 = vsel %vm162, %v163, %v158
      %v165 = vshrl.u32 %v164, 2
      %v166 = vand.u32 %v164, 3
      %v167 = vsub.s32 0, %v166
      %v168 = vsel %vm162, %v167, %v166
      %vm169 = vcmp.lt.s32.totalorder %v159, 0
      %v170 = vsub.s32 0, %v159
      %v171 = vsel %vm169, %v170, %v159
      %v172 = vshrl.u32 %v171, 2
      %v173 = vand.u32 %v171, 3
      %v174 = vsub.s32 0, %v173
      %v175 = vsel %vm169, %v174, %v173
      %vm176 = vcmp.lt.s32.totalorder %v160, 0
      %v177 = vsub.s32 0, %v160
      %v178 = vsel %vm176, %v177, %v160
      %v179 = vshrl.u32 %v178, 2
      %v180 = vand.u32 %v178, 3
      %v181 = vsub.s32 0, %v180
      %v182 = vsel %vm176, %v181, %v180
      %vm183 = vcmp.lt.s32.totalorder %v161, 0
      %v184 = vsub.s32 0, %v161
      %v185 = vsel %vm183, %v184, %v161
      %v186 = vshrl.u32 %v185, 2
      %v187 = vand.u32 %v185, 3
      %v188 = vsub.s32 0, %v187
      %v189 = vsel %vm183, %v188, %v187
      %vm190 = vcmp.ne.s32.totalorder %v168, 0
      %vm191 = vcmp.ne.s32.totalorder %v175, 0
      %vm192 = vcmp.ne.s32.totalorder %v182, 0
      %vm193 = vcmp.ne.s32.totalorder %v189, 0
      %vm194 = vcmp.lt.s32.totalorder %v168, 0
      %vm195 = vcmp.lt.s32.totalorder %v175, 0
      %vm196 = vcmp.lt.s32.totalorder %v182, 0
      %vm197 = vcmp.lt.s32.totalorder %v189, 0
      %vm198 = vmand %vm194, %vm190
      %vm199 = vmand %vm195, %vm191
      %vm200 = vmand %vm196, %vm192
      %vm201 = vmand %vm197, %vm193
      %v202 = vadd.s32 %v168, 4
      %v203 = vadd.s32 %v175, 4
      %v204 = vadd.s32 %v182, 4
      %v205 = vadd.s32 %v189, 4
      %v206 = vsel %vm198, %v202, %v168
      %v207 = vsel %vm199, %v203, %v175
      %v208 = vsel %vm200, %v204, %v182
      %v209 = vsel %vm201, %v205, %v189
      %v210 = vlaneseq
      %v211 = vand.u32 %v210, 127
      %vm212 = vcmp.eq.s32.totalorder %v206, %v211
      %vm213 = vcmp.eq.s32.totalorder %v207, %v211
      %vm214 = vcmp.eq.s32.totalorder %v208, %v211
      %vm215 = vcmp.eq.s32.totalorder %v209, %v211
      %v216 = vsel %vm212, 1, 0
      %v217 = vsel %vm213, 1, 0
      %v218 = vsel %vm214, 1, 0
      %v219 = vsel %vm215, 1, 0
      %v220 = vcvt.s32.f32 %v216
      %v221 = vcvt.s32.f32 %v217
      %v222 = vcvt.s32.f32 %v218
      %v223 = vcvt.s32.f32 %v219
      %vm224 = vcmask 261120
      %v226 = vsel %vm224, %v156, 0
      %228 = vmatprep.subr.mxu0 0.0
      %229 = vmatpush1.msra.mxu0 0.0
      %230 = vmatprep.subr.mxu0 0.0
      %231 = vmatpush1.msra.mxu0 0.0
      %232 = vmatprep.subr.mxu0 0.0
      %233 = vmatpush1.msra.mxu0 0.0
      %234 = vmatprep.subr.mxu0 0.0
      %235 = vmatpush1.msra.mxu0 0.0
      %236 = vmatprep.subr.mxu0 0.0
      %237 = vmatpush1.msra.mxu0 0.0
      %238 = vmatprep.subr.mxu0 0.0
      %239 = vmatpush1.msra.mxu0 0.0
      %240 = vmatprep.subr.mxu0 0.0
      %241 = vmatpush1.msra.mxu0 0.0
      %242 = vmatprep.subr.mxu0 0.0
      %243 = vmatpush1.msra.mxu0 0.0
      %244 = vmatprep.subr.mxu0 0.0
      %245 = vmatpush1.msra.mxu0 0.0
      %246 = vmatprep.subr.mxu0 0.0
      %247 = vmatpush1.msra.mxu0 0.0
      %248 = vmatprep.subr.mxu0 0.0
      %249 = vmatpush1.msra.mxu0 0.0
      %250 = vmatprep.subr.mxu0 0.0
      %251 = vmatpush1.msra.mxu0 0.0
      %252 = vmatprep.subr.mxu0 0.0
      %v253 = vand.u32 %v223, 4294901760
      %254 = vmatpush1.msra.mxu0 %v253
      %255 = vmatprep.subr.mxu0 0.0
      %v256 = vand.u32 %v222, 4294901760
      %257 = vmatpush1.msra.mxu0 %v256
      %258 = vmatprep.subr.mxu0 0.0
      %v259 = vand.u32 %v221, 4294901760
      %260 = vmatpush1.msra.mxu0 %v259
      %261 = vmatprep.subr.mxu0 0.0
      %v262 = vand.u32 %v220, 4294901760
      %263 = vmatpush1.msra.mxu0 %v262
      %264 = vmatprep.subr.mxu0 0.0
      %265 = vmatpush2.msra.mxu0 0.0
      %266 = vmatprep.subr.mxu0 0.0
      %267 = vmatpush2.msra.mxu0 0.0
      %268 = vmatprep.subr.mxu0 0.0
      %269 = vmatpush2.msra.mxu0 0.0
      %270 = vmatprep.subr.mxu0 0.0
      %271 = vmatpush2.msra.mxu0 0.0
      %272 = vmatprep.subr.mxu0 0.0
      %273 = vmatpush2.msra.mxu0 0.0
      %274 = vmatprep.subr.mxu0 0.0
      %275 = vmatpush2.msra.mxu0 0.0
      %276 = vmatprep.subr.mxu0 0.0
      %277 = vmatpush2.msra.mxu0 0.0
      %278 = vmatprep.subr.mxu0 0.0
      %279 = vmatpush2.msra.mxu0 0.0
      %280 = vmatprep.subr.mxu0 0.0
      %281 = vmatpush2.msra.mxu0 0.0
      %282 = vmatprep.subr.mxu0 0.0
      %283 = vmatpush2.msra.mxu0 0.0
      %284 = vmatprep.subr.mxu0 0.0
      %285 = vmatpush2.msra.mxu0 0.0
      %286 = vmatprep.subr.mxu0 0.0
      %287 = vmatpush2.msra.mxu0 0.0
      %288 = vmatprep.subr.mxu0 0.0
      %289 = vmatpush2.msra.mxu0 0.0
      %290 = vmatprep.subr.mxu0 0.0
      %291 = vmatpush2.msra.mxu0 0.0
      %292 = vmatprep.subr.mxu0 0.0
      %293 = vmatpush2.msra.mxu0 0.0
      %294 = vmatprep.subr.mxu0 0.0
      %295 = vmatpush2.msra.mxu0 0.0
      %296 = vmatprep.mubr.f32.mxu0 0.0
      %v297 = vand.u32 %v226, 4294901760
      %v298 = vsub.f32 %v226, %v297
      %v299 = vand.u32 %v298, 4294901760
      %v300 = vsub.f32 %v298, %v299
      %v301 = vand.u32 %v300, 4294901760
      %302 = vmatmul.mubr.f32.gmra.mxu0 %v301
      %v303 = vpop.f32.mrf.mxu0
      %v304 = vadd.f32 0.0, %v303
      %v305 = vpop.f32.mrf.mxu0
      %306 = vdwg.mxu0
      %307 = vmatprep.subr.mxu0 0.0
      %308 = vmatpush1.msra.mxu0 0.0
      %309 = vmatprep.subr.mxu0 0.0
      %310 = vmatpush1.msra.mxu0 0.0
      %311 = vmatprep.subr.mxu0 0.0
      %312 = vmatpush1.msra.mxu0 0.0
      %313 = vmatprep.subr.mxu0 0.0
      %314 = vmatpush1.msra.mxu0 0.0
      %315 = vmatprep.subr.mxu0 0.0
      %316 = vmatpush1.msra.mxu0 0.0
      %317 = vmatprep.subr.mxu0 0.0
      %318 = vmatpush1.msra.mxu0 0.0
      %319 = vmatprep.subr.mxu0 0.0
      %320 = vmatpush1.msra.mxu0 0.0
      %321 = vmatprep.subr.mxu0 0.0
      %322 = vmatpush1.msra.mxu0 0.0
      %323 = vmatprep.subr.mxu0 0.0
      %324 = vmatpush1.msra.mxu0 0.0
      %325 = vmatprep.subr.mxu0 0.0
      %326 = vmatpush1.msra.mxu0 0.0
      %327 = vmatprep.subr.mxu0 0.0
      %328 = vmatpush1.msra.mxu0 0.0
      %329 = vmatprep.subr.mxu0 0.0
      %330 = vmatpush1.msra.mxu0 0.0
      %331 = vmatprep.subr.mxu0 0.0
      %v332 = vand.u32 %v223, 4294901760
      %v333 = vsub.f32 %v223, %v332
      %v334 = vand.u32 %v333, 4294901760
      %v335 = vsub.f32 %v333, %v334
      %v336 = vand.u32 %v335, 4294901760
      %337 = vmatpush1.msra.mxu0 %v336
      %338 = vmatprep.subr.mxu0 0.0
      %v339 = vand.u32 %v222, 4294901760
      %v340 = vsub.f32 %v222, %v339
      %v341 = vand.u32 %v340, 4294901760
      %v342 = vsub.f32 %v340, %v341
      %v343 = vand.u32 %v342, 4294901760
      %344 = vmatpush1.msra.mxu0 %v343
      %345 = vmatprep.subr.mxu0 0.0
      %v346 = vand.u32 %v221, 4294901760
      %v347 = vsub.f32 %v221, %v346
      %v348 = vand.u32 %v347, 4294901760
      %v349 = vsub.f32 %v347, %v348
      %v350 = vand.u32 %v349, 4294901760
      %351 = vmatpush1.msra.mxu0 %v350
      %352 = vmatprep.subr.mxu0 0.0
      %v353 = vand.u32 %v220, 4294901760
      %v354 = vsub.f32 %v220, %v353
      %v355 = vand.u32 %v354, 4294901760
      %v356 = vsub.f32 %v354, %v355
      %v357 = vand.u32 %v356, 4294901760
      %358 = vmatpush1.msra.mxu0 %v357
      %359 = vmatprep.subr.mxu0 0.0
      %360 = vmatpush2.msra.mxu0 0.0
      %361 = vmatprep.subr.mxu0 0.0
      %362 = vmatpush2.msra.mxu0 0.0
      %363 = vmatprep.subr.mxu0 0.0
      %364 = vmatpush2.msra.mxu0 0.0
      %365 = vmatprep.subr.mxu0 0.0
      %366 = vmatpush2.msra.mxu0 0.0
      %367 = vmatprep.subr.mxu0 0.0
      %368 = vmatpush2.msra.mxu0 0.0
      %369 = vmatprep.subr.mxu0 0.0
      %370 = vmatpush2.msra.mxu0 0.0
      %371 = vmatprep.subr.mxu0 0.0
      %372 = vmatpush2.msra.mxu0 0.0
      %373 = vmatprep.subr.mxu0 0.0
      %374 = vmatpush2.msra.mxu0 0.0
      %375 = vmatprep.subr.mxu0 0.0
      %376 = vmatpush2.msra.mxu0 0.0
      %377 = vmatprep.subr.mxu0 0.0
      %378 = vmatpush2.msra.mxu0 0.0
      %379 = vmatprep.subr.mxu0 0.0
      %380 = vmatpush2.msra.mxu0 0.0
      %381 = vmatprep.subr.mxu0 0.0
      %382 = vmatpush2.msra.mxu0 0.0
      %383 = vmatprep.subr.mxu0 0.0
      %384 = vmatpush2.msra.mxu0 0.0
      %385 = vmatprep.subr.mxu0 0.0
      %386 = vmatpush2.msra.mxu0 0.0
      %387 = vmatprep.subr.mxu0 0.0
      %388 = vmatpush2.msra.mxu0 0.0
      %389 = vmatprep.subr.mxu0 0.0
      %390 = vmatpush2.msra.mxu0 0.0
      %391 = vmatprep.mubr.f32.mxu0 0.0
      %v392 = vand.u32 %v226, 4294901760
      %393 = vmatmul.mubr.f32.gmra.mxu0 %v392
      %v394 = vpop.f32.mrf.mxu0
      %v395 = vadd.f32 %v304, %v394
      %v396 = vpop.f32.mrf.mxu0
      %397 = vdwg.mxu0
      %398 = vmatprep.subr.mxu0 0.0
      %399 = vmatpush1.msra.mxu0 0.0
      %400 = vmatprep.subr.mxu0 0.0
      %401 = vmatpush1.msra.mxu0 0.0
      %402 = vmatprep.subr.mxu0 0.0
      %403 = vmatpush1.msra.mxu0 0.0
      %404 = vmatprep.subr.mxu0 0.0
      %405 = vmatpush1.msra.mxu0 0.0
      %406 = vmatprep.subr.mxu0 0.0
      %407 = vmatpush1.msra.mxu0 0.0
      %408 = vmatprep.subr.mxu0 0.0
      %409 = vmatpush1.msra.mxu0 0.0
      %410 = vmatprep.subr.mxu0 0.0
      %411 = vmatpush1.msra.mxu0 0.0
      %412 = vmatprep.subr.mxu0 0.0
      %413 = vmatpush1.msra.mxu0 0.0
      %414 = vmatprep.subr.mxu0 0.0
      %415 = vmatpush1.msra.mxu0 0.0
      %416 = vmatprep.subr.mxu0 0.0
      %417 = vmatpush1.msra.mxu0 0.0
      %418 = vmatprep.subr.mxu0 0.0
      %419 = vmatpush1.msra.mxu0 0.0
      %420 = vmatprep.subr.mxu0 0.0
      %421 = vmatpush1.msra.mxu0 0.0
      %422 = vmatprep.subr.mxu0 0.0
      %v423 = vand.u32 %v223, 4294901760
      %v424 = vsub.f32 %v223, %v423
      %425 = vmatpush1.msra.mxu0 %v424
      %426 = vmatprep.subr.mxu0 0.0
      %v427 = vand.u32 %v222, 4294901760
      %v428 = vsub.f32 %v222, %v427
      %429 = vmatpush1.msra.mxu0 %v428
      %430 = vmatprep.subr.mxu0 0.0
      %v431 = vand.u32 %v221, 4294901760
      %v432 = vsub.f32 %v221, %v431
      %433 = vmatpush1.msra.mxu0 %v432
      %434 = vmatprep.subr.mxu0 0.0
      %v435 = vand.u32 %v220, 4294901760
      %v436 = vsub.f32 %v220, %v435
      %437 = vmatpush1.msra.mxu0 %v436
      %438 = vmatprep.subr.mxu0 0.0
      %439 = vmatpush2.msra.mxu0 0.0
      %440 = vmatprep.subr.mxu0 0.0
      %441 = vmatpush2.msra.mxu0 0.0
      %442 = vmatprep.subr.mxu0 0.0
      %443 = vmatpush2.msra.mxu0 0.0
      %444 = vmatprep.subr.mxu0 0.0
      %445 = vmatpush2.msra.mxu0 0.0
      %446 = vmatprep.subr.mxu0 0.0
      %447 = vmatpush2.msra.mxu0 0.0
      %448 = vmatprep.subr.mxu0 0.0
      %449 = vmatpush2.msra.mxu0 0.0
      %450 = vmatprep.subr.mxu0 0.0
      %451 = vmatpush2.msra.mxu0 0.0
      %452 = vmatprep.subr.mxu0 0.0
      %453 = vmatpush2.msra.mxu0 0.0
      %454 = vmatprep.subr.mxu0 0.0
      %455 = vmatpush2.msra.mxu0 0.0
      %456 = vmatprep.subr.mxu0 0.0
      %457 = vmatpush2.msra.mxu0 0.0
      %458 = vmatprep.subr.mxu0 0.0
      %459 = vmatpush2.msra.mxu0 0.0
      %460 = vmatprep.subr.mxu0 0.0
      %461 = vmatpush2.msra.mxu0 0.0
      %462 = vmatprep.subr.mxu0 0.0
      %463 = vmatpush2.msra.mxu0 0.0
      %464 = vmatprep.subr.mxu0 0.0
      %465 = vmatpush2.msra.mxu0 0.0
      %466 = vmatprep.subr.mxu0 0.0
      %467 = vmatpush2.msra.mxu0 0.0
      %468 = vmatprep.subr.mxu0 0.0
      %469 = vmatpush2.msra.mxu0 0.0
      %470 = vmatprep.mubr.f32.mxu0 0.0
      %v471 = vand.u32 %v226, 4294901760
      %v472 = vsub.f32 %v226, %v471
      %473 = vmatmul.mubr.f32.gmra.mxu0 %v472
      %v474 = vpop.f32.mrf.mxu0
      %v475 = vadd.f32 %v395, %v474
      %v476 = vpop.f32.mrf.mxu0
      %477 = vdwg.mxu0
      %478 = vmatprep.subr.mxu0 0.0
      %479 = vmatpush1.msra.mxu0 0.0
      %480 = vmatprep.subr.mxu0 0.0
      %481 = vmatpush1.msra.mxu0 0.0
      %482 = vmatprep.subr.mxu0 0.0
      %483 = vmatpush1.msra.mxu0 0.0
      %484 = vmatprep.subr.mxu0 0.0
      %485 = vmatpush1.msra.mxu0 0.0
      %486 = vmatprep.subr.mxu0 0.0
      %487 = vmatpush1.msra.mxu0 0.0
      %488 = vmatprep.subr.mxu0 0.0
      %489 = vmatpush1.msra.mxu0 0.0
      %490 = vmatprep.subr.mxu0 0.0
      %491 = vmatpush1.msra.mxu0 0.0
      %492 = vmatprep.subr.mxu0 0.0
      %493 = vmatpush1.msra.mxu0 0.0
      %494 = vmatprep.subr.mxu0 0.0
      %495 = vmatpush1.msra.mxu0 0.0
      %496 = vmatprep.subr.mxu0 0.0
      %497 = vmatpush1.msra.mxu0 0.0
      %498 = vmatprep.subr.mxu0 0.0
      %499 = vmatpush1.msra.mxu0 0.0
      %500 = vmatprep.subr.mxu0 0.0
      %501 = vmatpush1.msra.mxu0 0.0
      %502 = vmatprep.subr.mxu0 0.0
      %v503 = vand.u32 %v223, 4294901760
      %504 = vmatpush1.msra.mxu0 %v503
      %505 = vmatprep.subr.mxu0 0.0
      %v506 = vand.u32 %v222, 4294901760
      %507 = vmatpush1.msra.mxu0 %v506
      %508 = vmatprep.subr.mxu0 0.0
      %v509 = vand.u32 %v221, 4294901760
      %510 = vmatpush1.msra.mxu0 %v509
      %511 = vmatprep.subr.mxu0 0.0
      %v512 = vand.u32 %v220, 4294901760
      %513 = vmatpush1.msra.mxu0 %v512
      %514 = vmatprep.subr.mxu0 0.0
      %515 = vmatpush2.msra.mxu0 0.0
      %516 = vmatprep.subr.mxu0 0.0
      %517 = vmatpush2.msra.mxu0 0.0
      %518 = vmatprep.subr.mxu0 0.0
      %519 = vmatpush2.msra.mxu0 0.0
      %520 = vmatprep.subr.mxu0 0.0
      %521 = vmatpush2.msra.mxu0 0.0
      %522 = vmatprep.subr.mxu0 0.0
      %523 = vmatpush2.msra.mxu0 0.0
      %524 = vmatprep.subr.mxu0 0.0
      %525 = vmatpush2.msra.mxu0 0.0
      %526 = vmatprep.subr.mxu0 0.0
      %527 = vmatpush2.msra.mxu0 0.0
      %528 = vmatprep.subr.mxu0 0.0
      %529 = vmatpush2.msra.mxu0 0.0
      %530 = vmatprep.subr.mxu0 0.0
      %531 = vmatpush2.msra.mxu0 0.0
      %532 = vmatprep.subr.mxu0 0.0
      %533 = vmatpush2.msra.mxu0 0.0
      %534 = vmatprep.subr.mxu0 0.0
      %535 = vmatpush2.msra.mxu0 0.0
      %536 = vmatprep.subr.mxu0 0.0
      %537 = vmatpush2.msra.mxu0 0.0
      %538 = vmatprep.subr.mxu0 0.0
      %539 = vmatpush2.msra.mxu0 0.0
      %540 = vmatprep.subr.mxu0 0.0
      %541 = vmatpush2.msra.mxu0 0.0
      %542 = vmatprep.subr.mxu0 0.0
      %543 = vmatpush2.msra.mxu0 0.0
      %544 = vmatprep.subr.mxu0 0.0
      %545 = vmatpush2.msra.mxu0 0.0
      %546 = vmatprep.mubr.f32.mxu0 0.0
      %v547 = vand.u32 %v226, 4294901760
      %v548 = vsub.f32 %v226, %v547
      %v549 = vand.u32 %v548, 4294901760
      %550 = vmatmul.mubr.f32.gmra.mxu0 %v549
      %v551 = vpop.f32.mrf.mxu0
      %v552 = vadd.f32 %v475, %v551
      %v553 = vpop.f32.mrf.mxu0
      %554 = vdwg.mxu0
      %555 = vmatprep.subr.mxu0 0.0
      %556 = vmatpush1.msra.mxu0 0.0
      %557 = vmatprep.subr.mxu0 0.0
      %558 = vmatpush1.msra.mxu0 0.0
      %559 = vmatprep.subr.mxu0 0.0
      %560 = vmatpush1.msra.mxu0 0.0
      %561 = vmatprep.subr.mxu0 0.0
      %562 = vmatpush1.msra.mxu0 0.0
      %563 = vmatprep.subr.mxu0 0.0
      %564 = vmatpush1.msra.mxu0 0.0
      %565 = vmatprep.subr.mxu0 0.0
      %566 = vmatpush1.msra.mxu0 0.0
      %567 = vmatprep.subr.mxu0 0.0
      %568 = vmatpush1.msra.mxu0 0.0
      %569 = vmatprep.subr.mxu0 0.0
      %570 = vmatpush1.msra.mxu0 0.0
      %571 = vmatprep.subr.mxu0 0.0
      %572 = vmatpush1.msra.mxu0 0.0
      %573 = vmatprep.subr.mxu0 0.0
      %574 = vmatpush1.msra.mxu0 0.0
      %575 = vmatprep.subr.mxu0 0.0
      %576 = vmatpush1.msra.mxu0 0.0
      %577 = vmatprep.subr.mxu0 0.0
      %578 = vmatpush1.msra.mxu0 0.0
      %579 = vmatprep.subr.mxu0 0.0
      %v580 = vand.u32 %v223, 4294901760
      %v581 = vsub.f32 %v223, %v580
      %v582 = vand.u32 %v581, 4294901760
      %583 = vmatpush1.msra.mxu0 %v582
      %584 = vmatprep.subr.mxu0 0.0
      %v585 = vand.u32 %v222, 4294901760
      %v586 = vsub.f32 %v222, %v585
      %v587 = vand.u32 %v586, 4294901760
      %588 = vmatpush1.msra.mxu0 %v587
      %589 = vmatprep.subr.mxu0 0.0
      %v590 = vand.u32 %v221, 4294901760
      %v591 = vsub.f32 %v221, %v590
      %v592 = vand.u32 %v591, 4294901760
      %593 = vmatpush1.msra.mxu0 %v592
      %594 = vmatprep.subr.mxu0 0.0
      %v595 = vand.u32 %v220, 4294901760
      %v596 = vsub.f32 %v220, %v595
      %v597 = vand.u32 %v596, 4294901760
      %598 = vmatpush1.msra.mxu0 %v597
      %599 = vmatprep.subr.mxu0 0.0
      %600 = vmatpush2.msra.mxu0 0.0
      %601 = vmatprep.subr.mxu0 0.0
      %602 = vmatpush2.msra.mxu0 0.0
      %603 = vmatprep.subr.mxu0 0.0
      %604 = vmatpush2.msra.mxu0 0.0
      %605 = vmatprep.subr.mxu0 0.0
      %606 = vmatpush2.msra.mxu0 0.0
      %607 = vmatprep.subr.mxu0 0.0
      %608 = vmatpush2.msra.mxu0 0.0
      %609 = vmatprep.subr.mxu0 0.0
      %610 = vmatpush2.msra.mxu0 0.0
      %611 = vmatprep.subr.mxu0 0.0
      %612 = vmatpush2.msra.mxu0 0.0
      %613 = vmatprep.subr.mxu0 0.0
      %614 = vmatpush2.msra.mxu0 0.0
      %615 = vmatprep.subr.mxu0 0.0
      %616 = vmatpush2.msra.mxu0 0.0
      %617 = vmatprep.subr.mxu0 0.0
      %618 = vmatpush2.msra.mxu0 0.0
      %619 = vmatprep.subr.mxu0 0.0
      %620 = vmatpush2.msra.mxu0 0.0
      %621 = vmatprep.subr.mxu0 0.0
      %622 = vmatpush2.msra.mxu0 0.0
      %623 = vmatprep.subr.mxu0 0.0
      %624 = vmatpush2.msra.mxu0 0.0
      %625 = vmatprep.subr.mxu0 0.0
      %626 = vmatpush2.msra.mxu0 0.0
      %627 = vmatprep.subr.mxu0 0.0
      %628 = vmatpush2.msra.mxu0 0.0
      %629 = vmatprep.subr.mxu0 0.0
      %630 = vmatpush2.msra.mxu0 0.0
      %631 = vmatprep.mubr.f32.mxu0 0.0
      %v632 = vand.u32 %v226, 4294901760
      %633 = vmatmul.mubr.f32.gmra.mxu0 %v632
      %v634 = vpop.f32.mrf.mxu0
      %v635 = vadd.f32 %v552, %v634
      %v636 = vpop.f32.mrf.mxu0
      %637 = vdwg.mxu0
      %638 = vmatprep.subr.mxu0 0.0
      %639 = vmatpush1.msra.mxu0 0.0
      %640 = vmatprep.subr.mxu0 0.0
      %641 = vmatpush1.msra.mxu0 0.0
      %642 = vmatprep.subr.mxu0 0.0
      %643 = vmatpush1.msra.mxu0 0.0
      %644 = vmatprep.subr.mxu0 0.0
      %645 = vmatpush1.msra.mxu0 0.0
      %646 = vmatprep.subr.mxu0 0.0
      %647 = vmatpush1.msra.mxu0 0.0
      %648 = vmatprep.subr.mxu0 0.0
      %649 = vmatpush1.msra.mxu0 0.0
      %650 = vmatprep.subr.mxu0 0.0
      %651 = vmatpush1.msra.mxu0 0.0
      %652 = vmatprep.subr.mxu0 0.0
      %653 = vmatpush1.msra.mxu0 0.0
      %654 = vmatprep.subr.mxu0 0.0
      %655 = vmatpush1.msra.mxu0 0.0
      %656 = vmatprep.subr.mxu0 0.0
      %657 = vmatpush1.msra.mxu0 0.0
      %658 = vmatprep.subr.mxu0 0.0
      %659 = vmatpush1.msra.mxu0 0.0
      %660 = vmatprep.subr.mxu0 0.0
      %661 = vmatpush1.msra.mxu0 0.0
      %662 = vmatprep.subr.mxu0 0.0
      %v663 = vand.u32 %v223, 4294901760
      %664 = vmatpush1.msra.mxu0 %v663
      %665 = vmatprep.subr.mxu0 0.0
      %v666 = vand.u32 %v222, 4294901760
      %667 = vmatpush1.msra.mxu0 %v666
      %668 = vmatprep.subr.mxu0 0.0
      %v669 = vand.u32 %v221, 4294901760
      %670 = vmatpush1.msra.mxu0 %v669
      %671 = vmatprep.subr.mxu0 0.0
      %v672 = vand.u32 %v220, 4294901760
      %673 = vmatpush1.msra.mxu0 %v672
      %674 = vmatprep.subr.mxu0 0.0
      %675 = vmatpush2.msra.mxu0 0.0
      %676 = vmatprep.subr.mxu0 0.0
      %677 = vmatpush2.msra.mxu0 0.0
      %678 = vmatprep.subr.mxu0 0.0
      %679 = vmatpush2.msra.mxu0 0.0
      %680 = vmatprep.subr.mxu0 0.0
      %681 = vmatpush2.msra.mxu0 0.0
      %682 = vmatprep.subr.mxu0 0.0
      %683 = vmatpush2.msra.mxu0 0.0
      %684 = vmatprep.subr.mxu0 0.0
      %685 = vmatpush2.msra.mxu0 0.0
      %686 = vmatprep.subr.mxu0 0.0
      %687 = vmatpush2.msra.mxu0 0.0
      %688 = vmatprep.subr.mxu0 0.0
      %689 = vmatpush2.msra.mxu0 0.0
      %690 = vmatprep.subr.mxu0 0.0
      %691 = vmatpush2.msra.mxu0 0.0
      %692 = vmatprep.subr.mxu0 0.0
      %693 = vmatpush2.msra.mxu0 0.0
      %694 = vmatprep.subr.mxu0 0.0
      %695 = vmatpush2.msra.mxu0 0.0
      %696 = vmatprep.subr.mxu0 0.0
      %697 = vmatpush2.msra.mxu0 0.0
      %698 = vmatprep.subr.mxu0 0.0
      %699 = vmatpush2.msra.mxu0 0.0
      %700 = vmatprep.subr.mxu0 0.0
      %701 = vmatpush2.msra.mxu0 0.0
      %702 = vmatprep.subr.mxu0 0.0
      %703 = vmatpush2.msra.mxu0 0.0
      %704 = vmatprep.subr.mxu0 0.0
      %705 = vmatpush2.msra.mxu0 0.0
      %706 = vmatprep.mubr.f32.mxu0 0.0
      %v707 = vand.u32 %v226, 4294901760
      %708 = vmatmul.mubr.f32.gmra.mxu0 %v707
      %v709 = vpop.f32.mrf.mxu0
      %v710 = vadd.f32 %v635, %v709
      %v711 = vpop.f32.mrf.mxu0
      %712 = vdwg.mxu0
      %v713 = vld [vmem:[%s151] sm:$0xff]
      %v714 = vcvt.s32.f32 %v713
      %v715 = vmax.f32 %v714, 1.0
      %v716 = vrcp.pop %v715
      %718 = vset.pattern.permute.xlu0 0
      %719 = vperm.xlu0 %718, %v716
      %v720 = vpop.permute.xlu0 %719
      %v722 = vmul.f32 %v710, %v720
      %vm723 = vcmask 31744
      %724 = vst.msk [vmem:[%s155] sm:$0xff] %vm723, %v722
      %p725 = scmp.lt.s32.totalorder %s13, 3
      %s726 = scalar_select %p725, %s13, 3
      %s727 = smul.addr %s726, 8
      %s728 = scalar_lea.vmem %s2, %s727
      // Predicated region
      $region29: #{tpu_custom_call.1} parent=27 // pred_check
        %p729 = pneg %p83
      $region30: #{tpu_custom_call.1} parent=27 // pred_check_branch
        %731 = sbr.rel (%p729) target = $region32
      $region31: #{tpu_custom_call.1} parent=27 // pred_region
        _
      $region32: #{tpu_custom_call.1} parent=27 // pred_fallthru
        _
    $region28: #{tpu_custom_call.1} parent=5 // pred_fallthru
      _
    %p732 = scmp.le.s32.totalorder 2, %s8
    // Predicated region
    $region33: #{tpu_custom_call.1} parent=5 // pred_check
      %p733 = pneg %p732
    $region34: #{tpu_custom_call.1} parent=5 // pred_check_branch
      %735 = sbr.rel (%p733) target = $region36
    $region35: #{tpu_custom_call.1} parent=5 // pred_region
      %s736 = ssub.s32 %s8, 2
      // Predicated region
      $region37: #{tpu_custom_call.1} parent=35 // pred_check
        %p737 = pneg %p89
      $region38: #{tpu_custom_call.1} parent=35 // pred_check_branch
        %739 = sbr.rel (%p737) target = $region40
      $region39: #{tpu_custom_call.1} parent=35 // pred_region
        %p740 = scmp.lt.s32.totalorder %s14, 3
        %s741 = scalar_select %p740, %s14, 3
        %s742 = smul.addr %s741, 8
        %s743 = scalar_lea.vmem %s2, %s742
      $region40: #{tpu_custom_call.1} parent=35 // pred_fallthru
        _
    $region36: #{tpu_custom_call.1} parent=5 // pred_fallthru
      _
  $region6: #{tpu_custom_call.1} parent=0 // loop_footer
    %s12 = sadd.s32 1, %s8
  $region7: #{tpu_custom_call.1} parent=0 // loop_footer_branch
    %7 = sbr.rel target = $region3
  $region8: #{tpu_custom_call.1} parent=0 // loop_exit
    _

</llo_original>
